<compile_context>
chip_gen: v6e
topology: v6e:2x2x1
jax: 0.10.0
libtpu: 0.0.40
codegen_flags: <defaults>
</compile_context>

<pallas_src>
import jax
import jax.numpy as jnp
from jax.experimental import pallas as pl
from jax.experimental.pallas import tpu as pltpu

LANE = 128
SUBLANE = 8
DEFAULT_MAX_TILE_B = 512  # sweep 256/512/1024 for realistic batches; re-derive for v7x's 64 MiB VMEM if dims grow


def _round_up(x, m):
    return ((x + m - 1) // m) * m


def _mlp_kernel(x_ref, w1_ref, b1_ref, w2_ref, b2_ref, o_ref):
    # Hidden layer: Linear + ReLU (activation='ReLU', act_param=[]).
    x = x_ref[...]
    h = jnp.dot(x, w1_ref[...], preferred_element_type=jnp.float32) + b1_ref[...]
    h = jnp.maximum(h, 0.0)
    # Final layer: Linear (no activation). Output lanes padded to a multiple
    # of 128, so this is an unmasked, lane-dense store.
    y = jnp.dot(h, w2_ref[...], preferred_element_type=jnp.float32) + b2_ref[...]
    o_ref[...] = y.astype(o_ref.dtype)


def init_raw_params(key, layer_dim_list):
    """Deterministic PyTorch-style (uniform +/- 1/sqrt(fan_in)) init, (out, in) layout."""
    d0, d1, d2, d3 = layer_dim_list
    k1, k2, k3, k4 = jax.random.split(key, 4)
    lim1 = 1.0 / jnp.sqrt(d0)
    lim2 = 1.0 / jnp.sqrt(d2)
    return {
        "w1": jax.random.uniform(k1, (d1, d0), jnp.float32, -lim1, lim1),
        "b1": jax.random.uniform(k2, (d1,), jnp.float32, -lim1, lim1),
        "w2": jax.random.uniform(k3, (d3, d2), jnp.float32, -lim2, lim2),
        "b2": jax.random.uniform(k4, (d3,), jnp.float32, -lim2, lim2),
    }


def prepare_params(raw, layer_dim_list):
    """One-time glue: transpose to (in, out) and zero-pad feature dims to 128 lanes.

    Hoisted out of the per-call wrapper so no transpose/reshape/pad ops are
    emitted in front of the custom call on every forward.
    Zero padding is exact: padded hidden columns are ReLU(0 + 0) = 0 and their
    w2 rows are 0, so they contribute nothing; padded output columns are
    sliced off by the wrapper.
    """
    d0, d1, d2, d3 = layer_dim_list
    assert d1 == d2, (
        "BaseDecoder's layer construction is only shape-consistent when "
        "layer_dim_list[1] == layer_dim_list[2]"
    )
    h_pad = _round_up(d1, LANE)
    o_pad = _round_up(d3, LANE)
    w1_t = jnp.zeros((d0, h_pad), jnp.float32).at[:, :d1].set(raw["w1"].T)
    b1 = jnp.zeros((1, h_pad), jnp.float32).at[:, :d1].set(raw["b1"])
    w2_t = jnp.zeros((h_pad, o_pad), jnp.float32).at[:d2, :d3].set(raw["w2"].T)
    b2 = jnp.zeros((1, o_pad), jnp.float32).at[:, :d3].set(raw["b2"])
    return {"w1_t": w1_t, "b1": b1, "w2_t": w2_t, "b2": b2, "d_out": d3}


def base_decoder_forward(x, prepared, max_tile_b=DEFAULT_MAX_TILE_B):
    """x: (B, d0) float32; prepared: output of prepare_params."""
    B, d0 = x.shape
    w1_t, b1 = prepared["w1_t"], prepared["b1"]
    w2_t, b2 = prepared["w2_t"], prepared["b2"]
    h_pad = w1_t.shape[1]
    o_pad = w2_t.shape[1]
    d_out = prepared["d_out"]

    # Batch tiling: largest tile up to max_tile_b, multiple of 8 sublanes.
    tile_b = _round_up(min(max_tile_b, _round_up(B, SUBLANE)), SUBLANE)
    b_pad = _round_up(B, tile_b)
    if b_pad != B:
        x = jnp.pad(x, ((0, b_pad - B), (0, 0)))
    grid = (b_pad // tile_b,)

    # VMEM budget: double-buffered streamed x/out tiles + resident weights (+headroom).
    resident_bytes = 4 * (d0 * h_pad + h_pad + h_pad * o_pad + o_pad)
    stream_bytes = 2 * 4 * tile_b * (d0 + o_pad)
    vmem_limit = int(min(max(4 * (resident_bytes + stream_bytes), 8 << 20), 100 << 20))

    flops = 2 * b_pad * (d0 * h_pad + h_pad * o_pad)
    bytes_accessed = 4 * (b_pad * (d0 + o_pad) + d0 * h_pad + h_pad + h_pad * o_pad + o_pad)
    cost = pl.CostEstimate(flops=flops, transcendentals=0, bytes_accessed=bytes_accessed)

    out = pl.pallas_call(
        _mlp_kernel,
        out_shape=jax.ShapeDtypeStruct((b_pad, o_pad), x.dtype),
        grid=grid,
        in_specs=[
            # Streamed per batch tile (double-buffered by the Pallas pipeline).
            pl.BlockSpec((tile_b, d0), lambda i: (i, 0)),
            # Constant-index blocks: weights/biases stay resident in VMEM.
            pl.BlockSpec((d0, h_pad), lambda i: (0, 0)),
            pl.BlockSpec((1, h_pad), lambda i: (0, 0)),
            pl.BlockSpec((h_pad, o_pad), lambda i: (0, 0)),
            pl.BlockSpec((1, o_pad), lambda i: (0, 0)),
        ],
        out_specs=pl.BlockSpec((tile_b, o_pad), lambda i: (i, 0)),
        compiler_params=pltpu.CompilerParams(
            dimension_semantics=("parallel",),  # independent batch tiles; 2x on v7x's 2 TCs
            vmem_limit_bytes=vmem_limit,
        ),
        cost_estimate=cost,
    )(x, w1_t, b1, w2_t, b2)

    # Strip batch padding and the lane padding of the output features.
    return out[:B, :d_out]


def reference_forward(x, raw):
    h = x @ raw["w1"].T + raw["b1"]
    h = jnp.maximum(h, 0.0)
    return h @ raw["w2"].T + raw["b2"]


if __name__ == "__main__":
    # layer_dim_list = [16, 32, 32, 24] -> Linear(16,32)+ReLU, Linear(32,24)
    layer_dim_list = [16, 32, 32, 24]
    batch = 100  # deliberately not tile-aligned: exercises batch padding + slicing

    key = jax.random.PRNGKey(0)
    kx, kp = jax.random.split(key)
    x = jax.random.normal(kx, (batch, layer_dim_list[0]), jnp.float32)

    raw = init_raw_params(kp, layer_dim_list)
    prepared = prepare_params(raw, layer_dim_list)  # one-time transpose + lane-pad

    # Small tile so the demo actually runs a multi-step pipelined grid (4 steps).
    out = base_decoder_forward(x, prepared, max_tile_b=32)
    out = jax.block_until_ready(out)

    ref = reference_forward(x, raw)
    assert out.shape == (batch, layer_dim_list[-1])
    assert jnp.allclose(out, ref, atol=1e-5, rtol=1e-5)

    print("KERNEL_OK")
</pallas_src>

<mosaic_0001>
module attributes {stable_mosaic.version = 11 : i64} {
  func.func @_mlp_kernel(%arg0: i32, %arg1: memref<32x16xf32, #tpu.memory_space<vmem>>, %arg2: memref<16x128xf32, #tpu.memory_space<vmem>>, %arg3: memref<1x128xf32, #tpu.memory_space<vmem>>, %arg4: memref<128x128xf32, #tpu.memory_space<vmem>>, %arg5: memref<1x128xf32, #tpu.memory_space<vmem>>, %arg6: memref<32x128xf32, #tpu.memory_space<vmem>>) attributes {dimension_semantics = [#tpu.dimension_semantics<parallel>], iteration_bounds = array<i64: 4>, scalar_prefetch = 0 : i64, scratch_operands = 0 : i64, tpu.core_type = #tpu.core_type<tc>, window_params = [{transform_indices = @transform_0, window_bounds = array<i64: 32, 16>}, {pipeline_mode = #tpu.pipeline_mode<synchronous>, transform_indices = @transform_1, window_bounds = array<i64: 16, 128>}, {pipeline_mode = #tpu.pipeline_mode<synchronous>, transform_indices = @transform_2, window_bounds = array<i64: 1, 128>}, {pipeline_mode = #tpu.pipeline_mode<synchronous>, transform_indices = @transform_3, window_bounds = array<i64: 128, 128>}, {pipeline_mode = #tpu.pipeline_mode<synchronous>, transform_indices = @transform_4, window_bounds = array<i64: 1, 128>}, {transform_indices = @transform_5, window_bounds = array<i64: 32, 128>}]} {
    %c0 = arith.constant 0 : index
    %c0_0 = arith.constant 0 : index
    %0 = vector.load %arg1[%c0, %c0_0] : memref<32x16xf32, #tpu.memory_space<vmem>>, vector<32x16xf32>
    %c0_1 = arith.constant 0 : index
    %c0_2 = arith.constant 0 : index
    %1 = vector.load %arg2[%c0_1, %c0_2] : memref<16x128xf32, #tpu.memory_space<vmem>>, vector<16x128xf32>
    %cst = arith.constant dense<0.000000e+00> : vector<32x128xf32>
    %2 = tpu.matmul %0, %1, %cst {dimension_numbers = #tpu.dot_dimension_numbers<[1], [0], [0], [1], [0, 0, 1, 1], [], []>} : vector<32x16xf32>, vector<16x128xf32>, vector<32x128xf32> -> vector<32x128xf32>
    %c0_3 = arith.constant 0 : index
    %c0_4 = arith.constant 0 : index
    %3 = vector.load %arg3[%c0_3, %c0_4] : memref<1x128xf32, #tpu.memory_space<vmem>>, vector<1x128xf32>
    %4 = vector.broadcast %3 : vector<1x128xf32> to vector<32x128xf32>
    %5 = arith.addf %2, %4 : vector<32x128xf32>
    %cst_5 = arith.constant 0.000000e+00 : f32
    %6 = vector.broadcast %cst_5 : f32 to vector<32x128xf32>
    %7 = arith.maximumf %5, %6 : vector<32x128xf32>
    %c0_6 = arith.constant 0 : index
    %c0_7 = arith.constant 0 : index
    %8 = vector.load %arg4[%c0_6, %c0_7] : memref<128x128xf32, #tpu.memory_space<vmem>>, vector<128x128xf32>
    %cst_8 = arith.constant dense<0.000000e+00> : vector<32x128xf32>
    %9 = tpu.matmul %7, %8, %cst_8 {dimension_numbers = #tpu.dot_dimension_numbers<[1], [0], [0], [1], [0, 0, 1, 1], [], []>} : vector<32x128xf32>, vector<128x128xf32>, vector<32x128xf32> -> vector<32x128xf32>
    %c0_9 = arith.constant 0 : index
    %c0_10 = arith.constant 0 : index
    %10 = vector.load %arg5[%c0_9, %c0_10] : memref<1x128xf32, #tpu.memory_space<vmem>>, vector<1x128xf32>
    %11 = vector.broadcast %10 : vector<1x128xf32> to vector<32x128xf32>
    %12 = arith.addf %9, %11 : vector<32x128xf32>
    %c0_11 = arith.constant 0 : index
    %c0_12 = arith.constant 0 : index
    %13 = vector.load %arg6[%c0_11, %c0_12] : memref<32x128xf32, #tpu.memory_space<vmem>>, vector<32x128xf32>
    tpu.vector_store %arg6[%c0_11, %c0_12], %12 {strides = array<i32>} : memref<32x128xf32, #tpu.memory_space<vmem>>, vector<32x128xf32>,
    return
  }
  func.func @transform_0(%arg0: i32) -> (i32, i32) {
    %c0_i32 = arith.constant 0 : i32
    %c0_i32_0 = arith.constant 0 : i32
    return %arg0, %c0_i32 : i32, i32
  }
  func.func @transform_1(%arg0: i32) -> (i32, i32) {
    %c0_i32 = arith.constant 0 : i32
    %c0_i32_0 = arith.constant 0 : i32
    %c0_i32_1 = arith.constant 0 : i32
    return %c0_i32, %c0_i32_0 : i32, i32
  }
  func.func @transform_2(%arg0: i32) -> (i32, i32) {
    %c0_i32 = arith.constant 0 : i32
    %c0_i32_0 = arith.constant 0 : i32
    %c0_i32_1 = arith.constant 0 : i32
    return %c0_i32, %c0_i32_0 : i32, i32
  }
  func.func @transform_3(%arg0: i32) -> (i32, i32) {
    %c0_i32 = arith.constant 0 : i32
    %c0_i32_0 = arith.constant 0 : i32
    %c0_i32_1 = arith.constant 0 : i32
    return %c0_i32, %c0_i32_0 : i32, i32
  }
  func.func @transform_4(%arg0: i32) -> (i32, i32) {
    %c0_i32 = arith.constant 0 : i32
    %c0_i32_0 = arith.constant 0 : i32
    %c0_i32_1 = arith.constant 0 : i32
    return %c0_i32, %c0_i32_0 : i32, i32
  }
  func.func @transform_5(%arg0: i32) -> (i32, i32) {
    %c0_i32 = arith.constant 0 : i32
    %c0_i32_0 = arith.constant 0 : i32
    return %arg0, %c0_i32 : i32, i32
  }
}

</mosaic_0001>

<llo_original>
// kernel: tpu_custom_call.1
$region0: #{tpu_custom_call.1}
  #allocation0 [shape = 'u32[]', space=smem, size = 0x4, offset = 0x4, fixed_abs, tag = 'smem constant byte address 0x4 - core index']
  #allocation1 [shape = 'u32[144,128]{1,0:T(1,128)}', space=vmem, size = 0x12000, scoped, tag = 'internal scratch']
  %s0 = inlined_call_operand.vmem [shape: f32[128,16], index: 0, kind: input, shape index: {}]
  %s1 = inlined_call_operand.vmem [shape: f32[16,128], index: 1, kind: input, shape index: {}]
  %s2 = inlined_call_operand.vmem [shape: f32[1,128], index: 2, kind: input, shape index: {}]
  %s3 = inlined_call_operand.vmem [shape: f32[128,128], index: 3, kind: input, shape index: {}]
  %s4 = inlined_call_operand.vmem [shape: f32[1,128], index: 4, kind: input, shape index: {}]
  %s5 = inlined_call_operand.hbm [shape: f32[128,128], index: 5, kind: output, shape index: {}]
  %s6 = sld [smem:[#allocation0]]
  $region53: #{tpu_custom_call.1} parent=0
    _
  %s8 = ssub.s32 1, %s6
  %s9 = scalar_select 0, %s8, %s6
  $region1: #{tpu_custom_call.1} parent=0
    #allocation2 [shape = 'u8[32768]{0}', space=vmem, size = 0x8000, scoped, tag = 'output window, operand 0']
    #allocation3 [shape = 's32[2]{0}', space=sflag, size = 0x8, scoped, tag = 'scoped memory for tpu_custom_call.1']
    %10 = vsyncpa [#allocation3], 0
    %s11 = scalar_lea.sflag [#allocation3], 1
    %12 = vsyncpa %s11, 0
    loop: start=0, step=1, limit=6
    $region2: #{tpu_custom_call.1} parent=1 // loop_pre_header
      _
    $region3: #{tpu_custom_call.1} parent=1 // loop_header
      %s14 = sphi 0, %s18
      %p15 = scmp.ge.s32.totalorder %s14, 6
      %s24 = sphi 0, %s26
      %s27 = sphi 0, %s24
      %s28 = sphi 0, %s27
      %s44 = sphi 0, %s28
      %s48 = sphi 0, %s48
      %s50 = sphi 0, %s48
      %s51 = sphi 0, %s50
      %s65 = sphi 0, %s51
      %s69 = sphi 0, %s69
      %s71 = sphi 0, %s69
      %s72 = sphi 0, %s71
      %s86 = sphi 0, %s72
      %s90 = sphi 0, %s90
      %s92 = sphi 0, %s90
      %s93 = sphi 0, %s92
      %s107 = sphi 0, %s93
      %s111 = sphi 0, %s111
      %s113 = sphi 0, %s111
      %s114 = sphi 0, %s113
      %s128 = sphi 0, %s114
      %s134 = sphi 0, %s136
      %s137 = sphi 0, %s134
      %s138 = sphi 0, %s137
      %s154 = sphi 0, %s138
    $region4: #{tpu_custom_call.1} parent=1 // loop_header_branch
      %17 = sbr.rel (%p15) target = $region8
    $region5: #{tpu_custom_call.1} parent=1 // loop_body
      %s19 = ssub.s32 %s14, 1
      %s20 = ssub.s32 %s14, 2
      %s21 = sadd.s32 %s14, 1
      %s22 = ssub.s32 %s14, %s21
      %p23 = scmp.eq.s32.totalorder %s22, 0
      %s25 = sadd.s32 %s24, 1
      %s26 = scalar_select %p23, %s24, %s25
      %p29 = pneg %p23
      %p30 = scmp.eq.s32.totalorder %s14, 3
      %p31 = por %p29, %p30
      %p32 = scmp.ne.s32.totalorder %s24, %s27
      %p33 = scmp.eq.s32.totalorder %s14, 0
      %p34 = por %p32, %p33
      %p35 = scmp.ne.s32.totalorder %s24, %s27
      %p36 = scmp.eq.s32.totalorder %s19, 3
      %p37 = por %p35, %p36
      %p38 = scmp.ne.s32.totalorder %s27, %s28
      %p39 = scmp.eq.s32.totalorder %s19, 0
      %p40 = por %p38, %p39
      %p41 = scmp.ne.s32.totalorder %s27, %s28
      %p42 = scmp.eq.s32.totalorder %s20, 3
      %p43 = por %p41, %p42
      %p45 = scmp.ne.s32.totalorder %s28, %s44
      %p46 = scmp.eq.s32.totalorder %s20, 0
      %p47 = por %p45, %p46
      %s49 = sadd.s32 %s48, 1
      %p52 = scmp.eq.s32.totalorder %s14, 3
      %p53 = scmp.ne.s32.totalorder %s48, %s50
      %p54 = scmp.eq.s32.totalorder %s14, 0
      %p55 = por %p53, %p54
      %p56 = scmp.ne.s32.totalorder %s48, %s50
      %p57 = scmp.eq.s32.totalorder %s19, 3
      %p58 = por %p56, %p57
      %p59 = scmp.ne.s32.totalorder %s50, %s51
      %p60 = scmp.eq.s32.totalorder %s19, 0
      %p61 = por %p59, %p60
      %p62 = scmp.ne.s32.totalorder %s50, %s51
      %p63 = scmp.eq.s32.totalorder %s20, 3
      %p64 = por %p62, %p63
      %p66 = scmp.ne.s32.totalorder %s51, %s65
      %p67 = scmp.eq.s32.totalorder %s20, 0
      %p68 = por %p66, %p67
      %s70 = sadd.s32 %s69, 1
      %p73 = scmp.eq.s32.totalorder %s14, 3
      %p74 = scmp.ne.s32.totalorder %s69, %s71
      %p75 = scmp.eq.s32.totalorder %s14, 0
      %p76 = por %p74, %p75
      %p77 = scmp.ne.s32.totalorder %s69, %s71
      %p78 = scmp.eq.s32.totalorder %s19, 3
      %p79 = por %p77, %p78
      %p80 = scmp.ne.s32.totalorder %s71, %s72
      %p81 = scmp.eq.s32.totalorder %s19, 0
      %p82 = por %p80, %p81
      %p83 = scmp.ne.s32.totalorder %s71, %s72
      %p84 = scmp.eq.s32.totalorder %s20, 3
      %p85 = por %p83, %p84
      %p87 = scmp.ne.s32.totalorder %s72, %s86
      %p88 = scmp.eq.s32.totalorder %s20, 0
      %p89 = por %p87, %p88
      %s91 = sadd.s32 %s90, 1
      %p94 = scmp.eq.s32.totalorder %s14, 3
      %p95 = scmp.ne.s32.totalorder %s90, %s92
      %p96 = scmp.eq.s32.totalorder %s14, 0
      %p97 = por %p95, %p96
      %p98 = scmp.ne.s32.totalorder %s90, %s92
      %p99 = scmp.eq.s32.totalorder %s19, 3
      %p100 = por %p98, %p99
      %p101 = scmp.ne.s32.totalorder %s92, %s93
      %p102 = scmp.eq.s32.totalorder %s19, 0
      %p103 = por %p101, %p102
      %p104 = scmp.ne.s32.totalorder %s92, %s93
      %p105 = scmp.eq.s32.totalorder %s20, 3
      %p106 = por %p104, %p105
      %p108 = scmp.ne.s32.totalorder %s93, %s107
      %p109 = scmp.eq.s32.totalorder %s20, 0
      %p110 = por %p108, %p109
      %s112 = sadd.s32 %s111, 1
      %p115 = scmp.eq.s32.totalorder %s14, 3
      %p116 = scmp.ne.s32.totalorder %s111, %s113
      %p117 = scmp.eq.s32.totalorder %s14, 0
      %p118 = por %p116, %p117
      %p119 = scmp.ne.s32.totalorder %s111, %s113
      %p120 = scmp.eq.s32.totalorder %s19, 3
      %p121 = por %p119, %p120
      %p122 = scmp.ne.s32.totalorder %s113, %s114
      %p123 = scmp.eq.s32.totalorder %s19, 0
      %p124 = por %p122, %p123
      %p125 = scmp.ne.s32.totalorder %s113, %s114
      %p126 = scmp.eq.s32.totalorder %s20, 3
      %p127 = por %p125, %p126
      %p129 = scmp.ne.s32.totalorder %s114, %s128
      %p130 = scmp.eq.s32.totalorder %s20, 0
      %p131 = por %p129, %p130
      %s132 = ssub.s32 %s14, %s21
      %p133 = scmp.eq.s32.totalorder %s132, 0
      %s135 = sadd.s32 %s134, 1
      %s136 = scalar_select %p133, %s134, %s135
      %p139 = pneg %p133
      %p140 = scmp.eq.s32.totalorder %s14, 3
      %p141 = por %p139, %p140
      %p142 = scmp.ne.s32.totalorder %s134, %s137
      %p143 = scmp.eq.s32.totalorder %s14, 0
      %p144 = por %p142, %p143
      %p145 = scmp.ne.s32.totalorder %s134, %s137
      %p146 = scmp.eq.s32.totalorder %s19, 3
      %p147 = por %p145, %p146
      %p148 = scmp.ne.s32.totalorder %s137, %s138
      %p149 = scmp.eq.s32.totalorder %s19, 0
      %p150 = por %p148, %p149
      %p151 = scmp.ne.s32.totalorder %s137, %s138
      %p152 = scmp.eq.s32.totalorder %s20, 3
      %p153 = por %p151, %p152
      %p155 = scmp.ne.s32.totalorder %s138, %s154
      %p156 = scmp.eq.s32.totalorder %s20, 0
      %p157 = por %p155, %p156
      %p158 = scmp.le.s32.totalorder 1, %s14
      %p159 = scmp.lt.s32.totalorder %s14, 5
      %p160 = pnand %p158, %p159
      %p161 = pneg %p160
      // Predicated region
      $region9: #{tpu_custom_call.1} parent=5 // pred_check
        _
      $region10: #{tpu_custom_call.1} parent=5 // pred_check_branch
        %163 = sbr.rel (%p160) target = $region12
      $region11: #{tpu_custom_call.1} parent=5 // pred_region
        %s164 = ssub.s32 %s14, 1
        // Predicated region
        $region13: #{tpu_custom_call.1} parent=11 // pred_check
          %p165 = pneg %p61
        $region14: #{tpu_custom_call.1} parent=11 // pred_check_branch
          %167 = sbr.rel (%p165) target = $region16
        $region15: #{tpu_custom_call.1} parent=11 // pred_region
          _
        $region16: #{tpu_custom_call.1} parent=11 // pred_fallthru
          _
        // Predicated region
        $region17: #{tpu_custom_call.1} parent=11 // pred_check
          %p168 = pneg %p82
        $region18: #{tpu_custom_call.1} parent=11 // pred_check_branch
          %170 = sbr.rel (%p168) target = $region20
        $region19: #{tpu_custom_call.1} parent=11 // pred_region
          _
        $region20: #{tpu_custom_call.1} parent=11 // pred_fallthru
          _
        // Predicated region
        $region21: #{tpu_custom_call.1} parent=11 // pred_check
          %p171 = pneg %p103
        $region22: #{tpu_custom_call.1} parent=11 // pred_check_branch
          %173 = sbr.rel (%p171) target = $region24
        $region23: #{tpu_custom_call.1} parent=11 // pred_region
          _
        $region24: #{tpu_custom_call.1} parent=11 // pred_fallthru
          _
        // Predicated region
        $region25: #{tpu_custom_call.1} parent=11 // pred_check
          %p174 = pneg %p124
        $region26: #{tpu_custom_call.1} parent=11 // pred_check_branch
          %176 = sbr.rel (%p174) target = $region28
        $region27: #{tpu_custom_call.1} parent=11 // pred_region
          _
        $region28: #{tpu_custom_call.1} parent=11 // pred_fallthru
          _
      $region12: #{tpu_custom_call.1} parent=5 // pred_fallthru
        _
      %p177 = scmp.lt.s32.totalorder %s14, 4
      // Predicated region
      $region29: #{tpu_custom_call.1} parent=5 // pred_check
        %p178 = pneg %p177
      $region30: #{tpu_custom_call.1} parent=5 // pred_check_branch
        %180 = sbr.rel (%p178) target = $region32
      $region31: #{tpu_custom_call.1} parent=5 // pred_region
        // Predicated region
        $region33: #{tpu_custom_call.1} parent=31 // pred_check
          %p181 = pneg %p34
        $region34: #{tpu_custom_call.1} parent=31 // pred_check_branch
          %183 = sbr.rel (%p181) target = $region36
        $region35: #{tpu_custom_call.1} parent=31 // pred_region
          %s184 = smul.u32 4, %s14
          %p185 = scmp.lt.s32.totalorder %s184, 15
          %s186 = scalar_select %p185, %s184, 15
          %s187 = smul.addr %s186, 8
          %s188 = scalar_lea.vmem %s0, %s187
          %s189 = smul.u32 4, %s14
        $region36: #{tpu_custom_call.1} parent=31 // pred_fallthru
          _
      $region32: #{tpu_custom_call.1} parent=5 // pred_fallthru
        _
      %p190 = scmp.le.s32.totalorder 1, %s14
      %p191 = scmp.lt.s32.totalorder %s14, 5
      %p192 = pnand %p190, %p191
      %p193 = pneg %p192
      // Predicated region
      $region37: #{tpu_custom_call.1} parent=5 // pred_check
        _
      $region38: #{tpu_custom_call.1} parent=5 // pred_check_branch
        %195 = sbr.rel (%p192) target = $region40
      $region39: #{tpu_custom_call.1} parent=5 // pred_region
        %s196 = ssub.s32 %s14, 1
        %s197 = smul.u32 4, %s19
        %p198 = scmp.lt.s32.totalorder %s197, 15
        %s199 = scalar_select %p198, %s197, 15
        %s200 = smul.addr %s199, 8
        %s201 = scalar_lea.vmem %s0, %s200
        %p202 = pneg %p40
        %p203 = pneg %p37
        %p204 = pneg %p61
        %p205 = pneg %p58
        %p206 = pneg %p82
        %p207 = pneg %p79
        %p208 = pneg %p103
        %p209 = pneg %p100
        %p210 = pneg %p124
        %p211 = pneg %p121
        %p212 = pneg %p150
        %p213 = pneg %p147
        %s214 = sand.u32 %s137, 1
        %s215 = scalar_lea.sflag [#allocation3], %s214
        %s216 = sand.u32 %s137, 1
        %s217 = smul.addr %s216, 32
        %s218 = scalar_lea.vmem [#allocation2], %s217
        %s219 = smul.u32 4, %s19
        %p220 = scmp.lt.s32.totalorder %s219, 15
        %s221 = scalar_select %p220, %s219, 15
        %s222 = smul.addr %s221, 8
        %s223 = scalar_lea.vmem %s0, %s222
        %s224 = smul.u32 4, %s19
        %s225 = smul.u32 4, %s19
        %v226 = vld [vmem:[%s223] sm:$0xff]
        %v227 = vld [vmem:[%s223 + $0x8] sm:$0xff]
        %v228 = vld [vmem:[%s223 + $0x10] sm:$0xff]
        %v229 = vld [vmem:[%s223 + $0x18] sm:$0xff]
        %v230 = vld [vmem:[%s1] sm:$0xff]
        %v231 = vld [vmem:[%s1 + $0x8] sm:$0xff]
        %v232 = vld [vmem:[%s2] sm:$0x1]
        %v234 = vlaneseq
        %v235 = vshrl.u32 %v234, 7
        %v236 = vsub.s32 0, %v235
        %v237 = vrot.slane %v232, %v236
        %vm239 = vcmask 130048
        %v241 = vsel %vm239, %v226, 0
        %v244 = vsel %vm239, %v227, 0
        %v247 = vsel %vm239, %v228, 0
        %v250 = vsel %vm239, %v229, 0
        %252 = vmatprep.subr.mxu0 0.0
        %253 = vmatpush1.msra.mxu0 0.0
        %254 = vmatprep.subr.mxu0 0.0
        %255 = vmatpush1.msra.mxu0 0.0
        %256 = vmatprep.subr.mxu0 0.0
        %257 = vmatpush1.msra.mxu0 0.0
        %258 = vmatprep.subr.mxu0 0.0
        %259 = vmatpush1.msra.mxu0 0.0
        %260 = vmatprep.subr.mxu0 0.0
        %261 = vmatpush1.msra.mxu0 0.0
        %262 = vmatprep.subr.mxu0 0.0
        %263 = vmatpush1.msra.mxu0 0.0
        %264 = vmatprep.subr.mxu0 0.0
        %265 = vmatpush1.msra.mxu0 0.0
        %266 = vmatprep.subr.mxu0 0.0
        %267 = vmatpush1.msra.mxu0 0.0
        %268 = vmatprep.subr.mxu0 0.0
        %269 = vmatpush1.msra.mxu0 0.0
        %270 = vmatprep.subr.mxu0 0.0
        %271 = vmatpush1.msra.mxu0 0.0
        %272 = vmatprep.subr.mxu0 0.0
        %273 = vmatpush1.msra.mxu0 0.0
        %274 = vmatprep.subr.mxu0 0.0
        %275 = vmatpush1.msra.mxu0 0.0
        %276 = vmatprep.subr.mxu0 0.0
        %277 = vmatpush1.msra.mxu0 0.0
        %278 = vmatprep.subr.mxu0 0.0
        %279 = vmatpush1.msra.mxu0 0.0
        %280 = vmatprep.subr.mxu0 0.0
        %281 = vmatpush1.msra.mxu0 %v231
        %282 = vmatprep.subr.mxu0 0.0
        %283 = vmatpush1.msra.mxu0 %v230
        %284 = vmatprep.subr.mxu0 0.0
        %285 = vmatpush2.msra.mxu0 0.0
        %286 = vmatprep.subr.mxu0 0.0
        %287 = vmatpush2.msra.mxu0 0.0
        %288 = vmatprep.subr.mxu0 0.0
        %289 = vmatpush2.msra.mxu0 0.0
        %290 = vmatprep.subr.mxu0 0.0
        %291 = vmatpush2.msra.mxu0 0.0
        %292 = vmatprep.subr.mxu0 0.0
        %293 = vmatpush2.msra.mxu0 0.0
        %294 = vmatprep.subr.mxu0 0.0
        %295 = vmatpush2.msra.mxu0 0.0
        %296 = vmatprep.subr.mxu0 0.0
        %297 = vmatpush2.msra.mxu0 0.0
        %298 = vmatprep.subr.mxu0 0.0
        %299 = vmatpush2.msra.mxu0 0.0
        %300 = vmatprep.subr.mxu0 0.0
        %301 = vmatpush2.msra.mxu0 0.0
        %302 = vmatprep.subr.mxu0 0.0
        %303 = vmatpush2.msra.mxu0 0.0
        %304 = vmatprep.subr.mxu0 0.0
        %305 = vmatpush2.msra.mxu0 0.0
        %306 = vmatprep.subr.mxu0 0.0
        %307 = vmatpush2.msra.mxu0 0.0
        %308 = vmatprep.subr.mxu0 0.0
        %309 = vmatpush2.msra.mxu0 0.0
        %310 = vmatprep.subr.mxu0 0.0
        %311 = vmatpush2.msra.mxu0 0.0
        %312 = vmatprep.subr.mxu0 0.0
        %313 = vmatpush2.msra.mxu0 0.0
        %314 = vmatprep.subr.mxu0 0.0
        %315 = vmatpush2.msra.mxu0 0.0
        %316 = vmatprep.mubr.f32.mxu0 0.0
        %317 = vmatmul.mubr.f32.gmra.mxu0 %v241
        %v318 = vpop.f32.mrf.mxu0
        %v319 = vadd.f32 %v237, %v318
        %v320 = vpop.f32.mrf.mxu0
        %321 = vmatprep.mubr.f32.mxu0 0.0
        %322 = vmatmul.mubr.f32.gmra.mxu0 %v244
        %v323 = vpop.f32.mrf.mxu0
        %v324 = vadd.f32 %v237, %v323
        %v325 = vpop.f32.mrf.mxu0
        %326 = vmatprep.mubr.f32.mxu0 0.0
        %327 = vmatmul.mubr.f32.gmra.mxu0 %v247
        %v328 = vpop.f32.mrf.mxu0
        %v329 = vadd.f32 %v237, %v328
        %v330 = vpop.f32.mrf.mxu0
        %331 = vmatprep.mubr.f32.mxu0 0.0
        %332 = vmatmul.mubr.f32.gmra.mxu0 %v250
        %v333 = vpop.f32.mrf.mxu0
        %v334 = vadd.f32 %v237, %v333
        %v335 = vpop.f32.mrf.mxu0
        %336 = vdwg.mxu0
        %v337 = vmax.f32 %v319, 0.0
        %v338 = vmax.f32 %v324, 0.0
        %v339 = vmax.f32 %v329, 0.0
        %v340 = vmax.f32 %v334, 0.0
        %v341 = vld [vmem:[%s3] sm:$0xff]
        %v342 = vld [vmem:[%s3 + $0x8] sm:$0xff]
        %v343 = vld [vmem:[%s3 + $0x10] sm:$0xff]
        %v344 = vld [vmem:[%s3 + $0x18] sm:$0xff]
        %v345 = vld [vmem:[%s3 + $0x20] sm:$0xff]
        %v346 = vld [vmem:[%s3 + $0x28] sm:$0xff]
        %v347 = vld [vmem:[%s3 + $0x30] sm:$0xff]
        %v348 = vld [vmem:[%s3 + $0x38] sm:$0xff]
        %v349 = vld [vmem:[%s3 + $0x40] sm:$0xff]
        %v350 = vld [vmem:[%s3 + $0x48] sm:$0xff]
        %v351 = vld [vmem:[%s3 + $0x50] sm:$0xff]
        %v352 = vld [vmem:[%s3 + $0x58] sm:$0xff]
        %v353 = vld [vmem:[%s3 + $0x60] sm:$0xff]
        %v354 = vld [vmem:[%s3 + $0x68] sm:$0xff]
        %v355 = vld [vmem:[%s3 + $0x70] sm:$0xff]
        %v356 = vld [vmem:[%s3 + $0x78] sm:$0xff]
        %v357 = vld [vmem:[%s4] sm:$0x1]
        %v359 = vlaneseq
        %v360 = vshrl.u32 %v359, 7
        %v361 = vsub.s32 0, %v360
        %v362 = vrot.slane %v357, %v361
        %364 = vmatprep.subr.mxu0 0.0
        %365 = vmatpush1.msra.mxu0 %v356
        %366 = vmatprep.subr.mxu0 0.0
        %367 = vmatpush1.msra.mxu0 %v355
        %368 = vmatprep.subr.mxu0 0.0
        %369 = vmatpush1.msra.mxu0 %v354
        %370 = vmatprep.subr.mxu0 0.0
        %371 = vmatpush1.msra.mxu0 %v353
        %372 = vmatprep.subr.mxu0 0.0
        %373 = vmatpush1.msra.mxu0 %v352
        %374 = vmatprep.subr.mxu0 0.0
        %375 = vmatpush1.msra.mxu0 %v351
        %376 = vmatprep.subr.mxu0 0.0
        %377 = vmatpush1.msra.mxu0 %v350
        %378 = vmatprep.subr.mxu0 0.0
        %379 = vmatpush1.msra.mxu0 %v349
        %380 = vmatprep.subr.mxu0 0.0
        %381 = vmatpush1.msra.mxu0 %v348
        %382 = vmatprep.subr.mxu0 0.0
        %383 = vmatpush1.msra.mxu0 %v347
        %384 = vmatprep.subr.mxu0 0.0
        %385 = vmatpush1.msra.mxu0 %v346
        %386 = vmatprep.subr.mxu0 0.0
        %387 = vmatpush1.msra.mxu0 %v345
        %388 = vmatprep.subr.mxu0 0.0
        %389 = vmatpush1.msra.mxu0 %v344
        %390 = vmatprep.subr.mxu0 0.0
        %391 = vmatpush1.msra.mxu0 %v343
        %392 = vmatprep.subr.mxu0 0.0
        %393 = vmatpush1.msra.mxu0 %v342
        %394 = vmatprep.subr.mxu0 0.0
        %395 = vmatpush1.msra.mxu0 %v341
        %396 = vmatprep.subr.mxu0 0.0
        %397 = vmatpush2.msra.mxu0 0.0
        %398 = vmatprep.subr.mxu0 0.0
        %399 = vmatpush2.msra.mxu0 0.0
        %400 = vmatprep.subr.mxu0 0.0
        %401 = vmatpush2.msra.mxu0 0.0
        %402 = vmatprep.subr.mxu0 0.0
        %403 = vmatpush2.msra.mxu0 0.0
        %404 = vmatprep.subr.mxu0 0.0
        %405 = vmatpush2.msra.mxu0 0.0
        %406 = vmatprep.subr.mxu0 0.0
        %407 = vmatpush2.msra.mxu0 0.0
        %408 = vmatprep.subr.mxu0 0.0
        %409 = vmatpush2.msra.mxu0 0.0
        %410 = vmatprep.subr.mxu0 0.0
        %411 = vmatpush2.msra.mxu0 0.0
        %412 = vmatprep.subr.mxu0 0.0
        %413 = vmatpush2.msra.mxu0 0.0
        %414 = vmatprep.subr.mxu0 0.0
        %415 = vmatpush2.msra.mxu0 0.0
        %416 = vmatprep.subr.mxu0 0.0
        %417 = vmatpush2.msra.mxu0 0.0
        %418 = vmatprep.subr.mxu0 0.0
        %419 = vmatpush2.msra.mxu0 0.0
        %420 = vmatprep.subr.mxu0 0.0
        %421 = vmatpush2.msra.mxu0 0.0
        %422 = vmatprep.subr.mxu0 0.0
        %423 = vmatpush2.msra.mxu0 0.0
        %424 = vmatprep.subr.mxu0 0.0
        %425 = vmatpush2.msra.mxu0 0.0
        %426 = vmatprep.subr.mxu0 0.0
        %427 = vmatpush2.msra.mxu0 0.0
        %428 = vmatprep.mubr.f32.mxu0 0.0
        %429 = vmatmul.mubr.f32.gmra.mxu0 %v337
        %v430 = vpop.f32.mrf.mxu0
        %v431 = vadd.f32 %v362, %v430
        %v432 = vpop.f32.mrf.mxu0
        %433 = vmatprep.mubr.f32.mxu0 0.0
        %434 = vmatmul.mubr.f32.gmra.mxu0 %v338
        %v435 = vpop.f32.mrf.mxu0
        %v436 = vadd.f32 %v362, %v435
        %v437 = vpop.f32.mrf.mxu0
        %438 = vmatprep.mubr.f32.mxu0 0.0
        %439 = vmatmul.mubr.f32.gmra.mxu0 %v339
        %v440 = vpop.f32.mrf.mxu0
        %v441 = vadd.f32 %v362, %v440
        %v442 = vpop.f32.mrf.mxu0
        %443 = vmatprep.mubr.f32.mxu0 0.0
        %444 = vmatmul.mubr.f32.gmra.mxu0 %v340
        %v445 = vpop.f32.mrf.mxu0
        %v446 = vadd.f32 %v362, %v445
        %v447 = vpop.f32.mrf.mxu0
        %448 = vdwg.mxu0
        %449 = vst [vmem:[%s218] sm:$0xff] %v431
        %450 = vst [vmem:[%s218 + $0x8] sm:$0xff] %v436
        %451 = vst [vmem:[%s218 + $0x10] sm:$0xff] %v441
        %452 = vst [vmem:[%s218 + $0x18] sm:$0xff] %v446
        %s453 = sand.u32 %s137, 1
        %s454 = scalar_lea.sflag [#allocation3], %s453
        %s455 = sand.u32 %s137, 1
        %s456 = smul.addr %s455, 32
        %s457 = scalar_lea.vmem [#allocation2], %s456
        // Predicated region
        $region41: #{tpu_custom_call.1} parent=39 // pred_check
          %p458 = pneg %p147
        $region42: #{tpu_custom_call.1} parent=39 // pred_check_branch
          %460 = sbr.rel (%p458) target = $region44
        $region43: #{tpu_custom_call.1} parent=39 // pred_region
          %s461 = smul.u32 4, %s19
          %s463 = ssub.s32 512, 512
          %464 = vsyncadd %s454, %s463
          %s465 = smul.addr %s461, 128
          %s466 = scalar_lea.hbm %s5, %s465
          %s467 = sshll.u32 %s457, 4
          %s468 = int_to_ptr.vmem [resolvable:$true] %s467
          %473 = dma.vmem_to_hbm [thread:$0]  %s468, 512, %s466, %s454, 128, 128, 8
        $region44: #{tpu_custom_call.1} parent=39 // pred_fallthru
          _
      $region40: #{tpu_custom_call.1} parent=5 // pred_fallthru
        _
      %p474 = scmp.le.s32.totalorder 2, %s14
      // Predicated region
      $region45: #{tpu_custom_call.1} parent=5 // pred_check
        %p475 = pneg %p474
      $region46: #{tpu_custom_call.1} parent=5 // pred_check_branch
        %477 = sbr.rel (%p475) target = $region48
      $region47: #{tpu_custom_call.1} parent=5 // pred_region
        %s478 = ssub.s32 %s14, 2
        // Predicated region
        $region49: #{tpu_custom_call.1} parent=47 // pred_check
          %p479 = pneg %p153
        $region50: #{tpu_custom_call.1} parent=47 // pred_check_branch
          %481 = sbr.rel (%p479) target = $region52
        $region51: #{tpu_custom_call.1} parent=47 // pred_region
          %s482 = sand.u32 %s138, 1
          %s483 = scalar_lea.sflag [#allocation3], %s482
          %s484 = sand.u32 %s138, 1
          %s485 = smul.addr %s484, 32
          %s486 = scalar_lea.vmem [#allocation2], %s485
          %487 = dma.done %s483, 512
        $region52: #{tpu_custom_call.1} parent=47 // pred_fallthru
          _
      $region48: #{tpu_custom_call.1} parent=5 // pred_fallthru
        _
    $region6: #{tpu_custom_call.1} parent=1 // loop_footer
      %s18 = sadd.s32 1, %s14
    $region7: #{tpu_custom_call.1} parent=1 // loop_footer_branch
      %13 = sbr.rel target = $region3
    $region8: #{tpu_custom_call.1} parent=1 // loop_exit
      _
    %488 = vsyncpa [#allocation3], 1
    %s489 = scalar_lea.sflag [#allocation3], 1
    %490 = vsyncpa %s489, 1

</llo_original>
